<compile_context>
chip_gen: v5e
topology: v5e:2x2
jax: 0.10.0
libtpu: 0.0.40
codegen_flags: <defaults>
</compile_context>

<pallas_src>
import functools

import jax
import jax.numpy as jnp
from jax.experimental import pallas as pl
from jax.experimental.pallas import tpu as pltpu

INPUT_DIM = 5
HIDDEN_DIM = 10

MIN_TILE = 8 * 128          # one sublane-packed batch "unit" (full (8,128) vreg footprint)
TILE_B = 128 * MIN_TILE     # 131072 batch elements per grid step by default


def _round_up(n: int, m: int) -> int:
    return ((n + m - 1) // m) * m


def _denoise_kernel(w1_ref, b1_ref, w2_ref, b2_ref, xz_ref, out_ref):
    """Sublane/lane-dense VPU-only forward pass.

    xz_ref : (F, 8, T/8)  VMEM   packed [x | z] tile (row F-1 is z), batch on (sublane, lane)
    w1_ref : (F, H)       SMEM
    b1_ref : (H,)         SMEM
    w2_ref : (H,)         SMEM
    b2_ref : (1,)         SMEM
    out_ref: (8, T/8)     VMEM   packed output tile
    """
    F = xz_ref.shape[0]
    H = b1_ref.shape[0]

    # Load every feature row once; each is a dense (8, T/8) f32 array (full vregs).
    rows = [xz_ref[k].astype(jnp.float32) for k in range(F)]

    acc = None
    for j in range(H):                               # fully unrolled hidden units
        h = rows[0] * w1_ref[0, j] + b1_ref[j]       # bias folded into first MAC
        for k in range(1, F):
            h = h + rows[k] * w1_ref[k, j]
        h = jnp.maximum(h, 0.0)
        term = h * w2_ref[j]
        acc = term if acc is None else acc + term
    acc = acc + b2_ref[0]

    out_ref[...] = acc.astype(out_ref.dtype)


@functools.partial(jax.jit, static_argnames=("tile_b",))
def denoise_block(x, z, w1, b1, w2, b2, tile_b: int = TILE_B):
    """Pallas equivalent of DenoiseBlock.forward(x, z).

    x: (B, INPUT_DIM), z: (B, 1) -> (B, 1)
    w1: (INPUT_DIM+1, H), b1: (H,), w2: (H, 1) or (H,), b2: (1,)
    """
    B, input_dim = x.shape
    F, H = w1.shape                     # F == input_dim + 1
    out_dtype = x.dtype

    # --- tile sizing: units of 1024 batch elements (one packed (8,128) vreg) ---
    n_units = pl.cdiv(B, MIN_TILE)
    req_units = max(1, tile_b // MIN_TILE)
    if n_units <= 1:
        units = 1
    else:
        # Keep >= 2 grid steps when there is enough work (v7x megacore), minimal padding.
        n_steps = max(2, pl.cdiv(n_units, req_units))
        units = pl.cdiv(n_units, n_steps)
    tile_b = units * MIN_TILE
    b_pad = _round_up(B, tile_b)
    cols = b_pad // 8
    c_tile = tile_b // 8
    grid = (b_pad // tile_b,)

    # --- layout plumbing (one XLA copy: concat + transpose + pad + pack; native dtype) ---
    # TODO(synk): with a feature-major caller-facing layout this wrapper pass disappears.
    xz = jnp.concatenate([x, z], axis=1)                                   # (B, F)
    xz_packed = jnp.pad(xz.T, ((0, 0), (0, b_pad - B))).reshape(F, 8, cols)

    # Scalar parameters -> SMEM (resident across all grid steps, no per-step DMA).
    w1_s = w1.astype(jnp.float32)                 # (F, H)
    b1_s = b1.astype(jnp.float32).reshape(H)      # (H,)
    w2_s = w2.astype(jnp.float32).reshape(H)      # (H,)
    b2_s = b2.astype(jnp.float32).reshape(1)      # (1,)

    smem = pl.BlockSpec(memory_space=pltpu.MemorySpace.SMEM)

    out_packed = pl.pallas_call(
        _denoise_kernel,
        out_shape=jax.ShapeDtypeStruct((8, cols), out_dtype),
        grid=grid,
        in_specs=[
            smem,  # w1
            smem,  # b1
            smem,  # w2
            smem,  # b2
            pl.BlockSpec((F, 8, c_tile), lambda i: (0, 0, i)),  # packed [x|z] tile
        ],
        out_specs=pl.BlockSpec((8, c_tile), lambda i: (0, i)),
        compiler_params=pltpu.CompilerParams(
            dimension_semantics=("parallel",)),
    )(w1_s, b1_s, w2_s, b2_s, xz_packed)

    # (8, b_pad/8) -> (b_pad,) restores original batch order; slice + add trailing 1-dim.
    return out_packed.reshape(b_pad)[:B, None]


def init_params(key, input_dim=INPUT_DIM, hidden_dim=HIDDEN_DIM):
    """Deterministic init mirroring nn.Linear defaults (U(-1/sqrt(fan_in), +))."""
    k1, k2, k3, k4 = jax.random.split(key, 4)
    fan_in1 = input_dim + 1
    bound1 = 1.0 / jnp.sqrt(fan_in1)
    w1 = jax.random.uniform(k1, (fan_in1, hidden_dim), jnp.float32, -bound1, bound1)
    b1 = jax.random.uniform(k2, (hidden_dim,), jnp.float32, -bound1, bound1)
    bound2 = 1.0 / jnp.sqrt(hidden_dim)
    w2 = jax.random.uniform(k3, (hidden_dim, 1), jnp.float32, -bound2, bound2)
    b2 = jax.random.uniform(k4, (1,), jnp.float32, -bound2, bound2)
    return w1, b1, w2, b2


def _reference(x, z, w1, b1, w2, b2):
    xz = jnp.concatenate([x, z], axis=1)
    return jnp.maximum(xz @ w1 + b1, 0.0) @ w2.reshape(-1, 1) + b2


if __name__ == "__main__":
    key = jax.random.PRNGKey(0)
    kx, kz, kp, kx2, kz2 = jax.random.split(key, 5)
    w1, b1, w2, b2 = init_params(kp)

    # Small shapes matching the module (batch=8, input_dim=5).
    B = 8
    x = jax.random.normal(kx, (B, INPUT_DIM), jnp.float32)
    z = jax.random.normal(kz, (B, 1), jnp.float32)

    out = jax.block_until_ready(denoise_block(x, z, w1, b1, w2, b2))
    ref = _reference(x, z, w1, b1, w2, b2)
    assert out.shape == (B, 1)
    assert jnp.allclose(out, ref, atol=1e-5, rtol=1e-5)

    # Second check: padding tail + a multi-step batch grid (grid=(3,) at tile_b=1024).
    B2 = 2500
    x2 = jax.random.normal(kx2, (B2, INPUT_DIM), jnp.float32)
    z2 = jax.random.normal(kz2, (B2, 1), jnp.float32)
    out2 = jax.block_until_ready(denoise_block(x2, z2, w1, b1, w2, b2, tile_b=1024))
    ref2 = _reference(x2, z2, w1, b1, w2, b2)
    assert out2.shape == (B2, 1)
    assert jnp.allclose(out2, ref2, atol=1e-5, rtol=1e-5)

    print("KERNEL_OK")
</pallas_src>

<mosaic_0001>
module attributes {stable_mosaic.version = 11 : i64} {
  func.func @_denoise_kernel(%arg0: i32, %arg1: memref<6x10xf32, #tpu.memory_space<smem>>, %arg2: memref<10xf32, #tpu.memory_space<smem>>, %arg3: memref<10xf32, #tpu.memory_space<smem>>, %arg4: memref<1xf32, #tpu.memory_space<smem>>, %arg5: memref<6x8x128xf32, #tpu.memory_space<vmem>>, %arg6: memref<8x128xf32, #tpu.memory_space<vmem>>) attributes {dimension_semantics = [#tpu.dimension_semantics<parallel>], iteration_bounds = array<i64: 1>, scalar_prefetch = 0 : i64, scratch_operands = 0 : i64, tpu.core_type = #tpu.core_type<tc>, window_params = [{transform_indices = @transform_0, window_bounds = array<i64: 6, 10>}, {transform_indices = @transform_1, window_bounds = array<i64: 10>}, {transform_indices = @transform_2, window_bounds = array<i64: 10>}, {transform_indices = @transform_3, window_bounds = array<i64: 1>}, {transform_indices = @transform_4, window_bounds = array<i64: 6, 8, 128>}, {transform_indices = @transform_5, window_bounds = array<i64: 8, 128>}]} {
    %c0 = arith.constant 0 : index
    %c0_0 = arith.constant 0 : index
    %c0_1 = arith.constant 0 : index
    %0 = vector.load %arg5[%c0, %c0_0, %c0_1] : memref<6x8x128xf32, #tpu.memory_space<vmem>>, vector<1x8x128xf32>
    %1 = vector.shape_cast %0 : vector<1x8x128xf32> to vector<8x128xf32>
    %c1 = arith.constant 1 : index
    %c0_2 = arith.constant 0 : index
    %c0_3 = arith.constant 0 : index
    %2 = vector.load %arg5[%c1, %c0_2, %c0_3] : memref<6x8x128xf32, #tpu.memory_space<vmem>>, vector<1x8x128xf32>
    %3 = vector.shape_cast %2 : vector<1x8x128xf32> to vector<8x128xf32>
    %c2 = arith.constant 2 : index
    %c0_4 = arith.constant 0 : index
    %c0_5 = arith.constant 0 : index
    %4 = vector.load %arg5[%c2, %c0_4, %c0_5] : memref<6x8x128xf32, #tpu.memory_space<vmem>>, vector<1x8x128xf32>
    %5 = vector.shape_cast %4 : vector<1x8x128xf32> to vector<8x128xf32>
    %c3 = arith.constant 3 : index
    %c0_6 = arith.constant 0 : index
    %c0_7 = arith.constant 0 : index
    %6 = vector.load %arg5[%c3, %c0_6, %c0_7] : memref<6x8x128xf32, #tpu.memory_space<vmem>>, vector<1x8x128xf32>
    %7 = vector.shape_cast %6 : vector<1x8x128xf32> to vector<8x128xf32>
    %c4 = arith.constant 4 : index
    %c0_8 = arith.constant 0 : index
    %c0_9 = arith.constant 0 : index
    %8 = vector.load %arg5[%c4, %c0_8, %c0_9] : memref<6x8x128xf32, #tpu.memory_space<vmem>>, vector<1x8x128xf32>
    %9 = vector.shape_cast %8 : vector<1x8x128xf32> to vector<8x128xf32>
    %c5 = arith.constant 5 : index
    %c0_10 = arith.constant 0 : index
    %c0_11 = arith.constant 0 : index
    %10 = vector.load %arg5[%c5, %c0_10, %c0_11] : memref<6x8x128xf32, #tpu.memory_space<vmem>>, vector<1x8x128xf32>
    %11 = vector.shape_cast %10 : vector<1x8x128xf32> to vector<8x128xf32>
    %c0_12 = arith.constant 0 : index
    %c0_13 = arith.constant 0 : index
    %12 = memref.load %arg1[%c0_12, %c0_13] : memref<6x10xf32, #tpu.memory_space<smem>>
    %13 = vector.broadcast %12 : f32 to vector<8x128xf32>
    %14 = arith.mulf %1, %13 : vector<8x128xf32>
    %c0_14 = arith.constant 0 : index
    %15 = memref.load %arg2[%c0_14] : memref<10xf32, #tpu.memory_space<smem>>
    %16 = vector.broadcast %15 : f32 to vector<8x128xf32>
    %17 = arith.addf %14, %16 : vector<8x128xf32>
    %c1_15 = arith.constant 1 : index
    %c0_16 = arith.constant 0 : index
    %18 = memref.load %arg1[%c1_15, %c0_16] : memref<6x10xf32, #tpu.memory_space<smem>>
    %19 = vector.broadcast %18 : f32 to vector<8x128xf32>
    %20 = arith.mulf %3, %19 : vector<8x128xf32>
    %21 = arith.addf %17, %20 : vector<8x128xf32>
    %c2_17 = arith.constant 2 : index
    %c0_18 = arith.constant 0 : index
    %22 = memref.load %arg1[%c2_17, %c0_18] : memref<6x10xf32, #tpu.memory_space<smem>>
    %23 = vector.broadcast %22 : f32 to vector<8x128xf32>
    %24 = arith.mulf %5, %23 : vector<8x128xf32>
    %25 = arith.addf %21, %24 : vector<8x128xf32>
    %c3_19 = arith.constant 3 : index
    %c0_20 = arith.constant 0 : index
    %26 = memref.load %arg1[%c3_19, %c0_20] : memref<6x10xf32, #tpu.memory_space<smem>>
    %27 = vector.broadcast %26 : f32 to vector<8x128xf32>
    %28 = arith.mulf %7, %27 : vector<8x128xf32>
    %29 = arith.addf %25, %28 : vector<8x128xf32>
    %c4_21 = arith.constant 4 : index
    %c0_22 = arith.constant 0 : index
    %30 = memref.load %arg1[%c4_21, %c0_22] : memref<6x10xf32, #tpu.memory_space<smem>>
    %31 = vector.broadcast %30 : f32 to vector<8x128xf32>
    %32 = arith.mulf %9, %31 : vector<8x128xf32>
    %33 = arith.addf %29, %32 : vector<8x128xf32>
    %c5_23 = arith.constant 5 : index
    %c0_24 = arith.constant 0 : index
    %34 = memref.load %arg1[%c5_23, %c0_24] : memref<6x10xf32, #tpu.memory_space<smem>>
    %35 = vector.broadcast %34 : f32 to vector<8x128xf32>
    %36 = arith.mulf %11, %35 : vector<8x128xf32>
    %37 = arith.addf %33, %36 : vector<8x128xf32>
    %cst = arith.constant 0.000000e+00 : f32
    %38 = vector.broadcast %cst : f32 to vector<8x128xf32>
    %39 = arith.maximumf %37, %38 : vector<8x128xf32>
    %c0_25 = arith.constant 0 : index
    %40 = memref.load %arg3[%c0_25] : memref<10xf32, #tpu.memory_space<smem>>
    %41 = vector.broadcast %40 : f32 to vector<8x128xf32>
    %42 = arith.mulf %39, %41 : vector<8x128xf32>
    %c0_26 = arith.constant 0 : index
    %c1_27 = arith.constant 1 : index
    %43 = memref.load %arg1[%c0_26, %c1_27] : memref<6x10xf32, #tpu.memory_space<smem>>
    %44 = vector.broadcast %43 : f32 to vector<8x128xf32>
    %45 = arith.mulf %1, %44 : vector<8x128xf32>
    %c1_28 = arith.constant 1 : index
    %46 = memref.load %arg2[%c1_28] : memref<10xf32, #tpu.memory_space<smem>>
    %47 = vector.broadcast %46 : f32 to vector<8x128xf32>
    %48 = arith.addf %45, %47 : vector<8x128xf32>
    %c1_29 = arith.constant 1 : index
    %c1_30 = arith.constant 1 : index
    %49 = memref.load %arg1[%c1_29, %c1_30] : memref<6x10xf32, #tpu.memory_space<smem>>
    %50 = vector.broadcast %49 : f32 to vector<8x128xf32>
    %51 = arith.mulf %3, %50 : vector<8x128xf32>
    %52 = arith.addf %48, %51 : vector<8x128xf32>
    %c2_31 = arith.constant 2 : index
    %c1_32 = arith.constant 1 : index
    %53 = memref.load %arg1[%c2_31, %c1_32] : memref<6x10xf32, #tpu.memory_space<smem>>
    %54 = vector.broadcast %53 : f32 to vector<8x128xf32>
    %55 = arith.mulf %5, %54 : vector<8x128xf32>
    %56 = arith.addf %52, %55 : vector<8x128xf32>
    %c3_33 = arith.constant 3 : index
    %c1_34 = arith.constant 1 : index
    %57 = memref.load %arg1[%c3_33, %c1_34] : memref<6x10xf32, #tpu.memory_space<smem>>
    %58 = vector.broadcast %57 : f32 to vector<8x128xf32>
    %59 = arith.mulf %7, %58 : vector<8x128xf32>
    %60 = arith.addf %56, %59 : vector<8x128xf32>
    %c4_35 = arith.constant 4 : index
    %c1_36 = arith.constant 1 : index
    %61 = memref.load %arg1[%c4_35, %c1_36] : memref<6x10xf32, #tpu.memory_space<smem>>
    %62 = vector.broadcast %61 : f32 to vector<8x128xf32>
    %63 = arith.mulf %9, %62 : vector<8x128xf32>
    %64 = arith.addf %60, %63 : vector<8x128xf32>
    %c5_37 = arith.constant 5 : index
    %c1_38 = arith.constant 1 : index
    %65 = memref.load %arg1[%c5_37, %c1_38] : memref<6x10xf32, #tpu.memory_space<smem>>
    %66 = vector.broadcast %65 : f32 to vector<8x128xf32>
    %67 = arith.mulf %11, %66 : vector<8x128xf32>
    %68 = arith.addf %64, %67 : vector<8x128xf32>
    %cst_39 = arith.constant 0.000000e+00 : f32
    %69 = vector.broadcast %cst_39 : f32 to vector<8x128xf32>
    %70 = arith.maximumf %68, %69 : vector<8x128xf32>
    %c1_40 = arith.constant 1 : index
    %71 = memref.load %arg3[%c1_40] : memref<10xf32, #tpu.memory_space<smem>>
    %72 = vector.broadcast %71 : f32 to vector<8x128xf32>
    %73 = arith.mulf %70, %72 : vector<8x128xf32>
    %74 = arith.addf %42, %73 : vector<8x128xf32>
    %c0_41 = arith.constant 0 : index
    %c2_42 = arith.constant 2 : index
    %75 = memref.load %arg1[%c0_41, %c2_42] : memref<6x10xf32, #tpu.memory_space<smem>>
    %76 = vector.broadcast %75 : f32 to vector<8x128xf32>
    %77 = arith.mulf %1, %76 : vector<8x128xf32>
    %c2_43 = arith.constant 2 : index
    %78 = memref.load %arg2[%c2_43] : memref<10xf32, #tpu.memory_space<smem>>
    %79 = vector.broadcast %78 : f32 to vector<8x128xf32>
    %80 = arith.addf %77, %79 : vector<8x128xf32>
    %c1_44 = arith.constant 1 : index
    %c2_45 = arith.constant 2 : index
    %81 = memref.load %arg1[%c1_44, %c2_45] : memref<6x10xf32, #tpu.memory_space<smem>>
    %82 = vector.broadcast %81 : f32 to vector<8x128xf32>
    %83 = arith.mulf %3, %82 : vector<8x128xf32>
    %84 = arith.addf %80, %83 : vector<8x128xf32>
    %c2_46 = arith.constant 2 : index
    %c2_47 = arith.constant 2 : index
    %85 = memref.load %arg1[%c2_46, %c2_47] : memref<6x10xf32, #tpu.memory_space<smem>>
    %86 = vector.broadcast %85 : f32 to vector<8x128xf32>
    %87 = arith.mulf %5, %86 : vector<8x128xf32>
    %88 = arith.addf %84, %87 : vector<8x128xf32>
    %c3_48 = arith.constant 3 : index
    %c2_49 = arith.constant 2 : index
    %89 = memref.load %arg1[%c3_48, %c2_49] : memref<6x10xf32, #tpu.memory_space<smem>>
    %90 = vector.broadcast %89 : f32 to vector<8x128xf32>
    %91 = arith.mulf %7, %90 : vector<8x128xf32>
    %92 = arith.addf %88, %91 : vector<8x128xf32>
    %c4_50 = arith.constant 4 : index
    %c2_51 = arith.constant 2 : index
    %93 = memref.load %arg1[%c4_50, %c2_51] : memref<6x10xf32, #tpu.memory_space<smem>>
    %94 = vector.broadcast %93 : f32 to vector<8x128xf32>
    %95 = arith.mulf %9, %94 : vector<8x128xf32>
    %96 = arith.addf %92, %95 : vector<8x128xf32>
    %c5_52 = arith.constant 5 : index
    %c2_53 = arith.constant 2 : index
    %97 = memref.load %arg1[%c5_52, %c2_53] : memref<6x10xf32, #tpu.memory_space<smem>>
    %98 = vector.broadcast %97 : f32 to vector<8x128xf32>
    %99 = arith.mulf %11, %98 : vector<8x128xf32>
    %100 = arith.addf %96, %99 : vector<8x128xf32>
    %cst_54 = arith.constant 0.000000e+00 : f32
    %101 = vector.broadcast %cst_54 : f32 to vector<8x128xf32>
    %102 = arith.maximumf %100, %101 : vector<8x128xf32>
    %c2_55 = arith.constant 2 : index
    %103 = memref.load %arg3[%c2_55] : memref<10xf32, #tpu.memory_space<smem>>
    %104 = vector.broadcast %103 : f32 to vector<8x128xf32>
    %105 = arith.mulf %102, %104 : vector<8x128xf32>
    %106 = arith.addf %74, %105 : vector<8x128xf32>
    %c0_56 = arith.constant 0 : index
    %c3_57 = arith.constant 3 : index
    %107 = memref.load %arg1[%c0_56, %c3_57] : memref<6x10xf32, #tpu.memory_space<smem>>
    %108 = vector.broadcast %107 : f32 to vector<8x128xf32>
    %109 = arith.mulf %1, %108 : vector<8x128xf32>
    %c3_58 = arith.constant 3 : index
    %110 = memref.load %arg2[%c3_58] : memref<10xf32, #tpu.memory_space<smem>>
    %111 = vector.broadcast %110 : f32 to vector<8x128xf32>
    %112 = arith.addf %109, %111 : vector<8x128xf32>
    %c1_59 = arith.constant 1 : index
    %c3_60 = arith.constant 3 : index
    %113 = memref.load %arg1[%c1_59, %c3_60] : memref<6x10xf32, #tpu.memory_space<smem>>
    %114 = vector.broadcast %113 : f32 to vector<8x128xf32>
    %115 = arith.mulf %3, %114 : vector<8x128xf32>
    %116 = arith.addf %112, %115 : vector<8x128xf32>
    %c2_61 = arith.constant 2 : index
    %c3_62 = arith.constant 3 : index
    %117 = memref.load %arg1[%c2_61, %c3_62] : memref<6x10xf32, #tpu.memory_space<smem>>
    %118 = vector.broadcast %117 : f32 to vector<8x128xf32>
    %119 = arith.mulf %5, %118 : vector<8x128xf32>
    %120 = arith.addf %116, %119 : vector<8x128xf32>
    %c3_63 = arith.constant 3 : index
    %c3_64 = arith.constant 3 : index
    %121 = memref.load %arg1[%c3_63, %c3_64] : memref<6x10xf32, #tpu.memory_space<smem>>
    %122 = vector.broadcast %121 : f32 to vector<8x128xf32>
    %123 = arith.mulf %7, %122 : vector<8x128xf32>
    %124 = arith.addf %120, %123 : vector<8x128xf32>
    %c4_65 = arith.constant 4 : index
    %c3_66 = arith.constant 3 : index
    %125 = memref.load %arg1[%c4_65, %c3_66] : memref<6x10xf32, #tpu.memory_space<smem>>
    %126 = vector.broadcast %125 : f32 to vector<8x128xf32>
    %127 = arith.mulf %9, %126 : vector<8x128xf32>
    %128 = arith.addf %124, %127 : vector<8x128xf32>
    %c5_67 = arith.constant 5 : index
    %c3_68 = arith.constant 3 : index
    %129 = memref.load %arg1[%c5_67, %c3_68] : memref<6x10xf32, #tpu.memory_space<smem>>
    %130 = vector.broadcast %129 : f32 to vector<8x128xf32>
    %131 = arith.mulf %11, %130 : vector<8x128xf32>
    %132 = arith.addf %128, %131 : vector<8x128xf32>
    %cst_69 = arith.constant 0.000000e+00 : f32
    %133 = vector.broadcast %cst_69 : f32 to vector<8x128xf32>
    %134 = arith.maximumf %132, %133 : vector<8x128xf32>
    %c3_70 = arith.constant 3 : index
    %135 = memref.load %arg3[%c3_70] : memref<10xf32, #tpu.memory_space<smem>>
    %136 = vector.broadcast %135 : f32 to vector<8x128xf32>
    %137 = arith.mulf %134, %136 : vector<8x128xf32>
    %138 = arith.addf %106, %137 : vector<8x128xf32>
    %c0_71 = arith.constant 0 : index
    %c4_72 = arith.constant 4 : index
    %139 = memref.load %arg1[%c0_71, %c4_72] : memref<6x10xf32, #tpu.memory_space<smem>>
    %140 = vector.broadcast %139 : f32 to vector<8x128xf32>
    %141 = arith.mulf %1, %140 : vector<8x128xf32>
    %c4_73 = arith.constant 4 : index
    %142 = memref.load %arg2[%c4_73] : memref<10xf32, #tpu.memory_space<smem>>
    %143 = vector.broadcast %142 : f32 to vector<8x128xf32>
    %144 = arith.addf %141, %143 : vector<8x128xf32>
    %c1_74 = arith.constant 1 : index
    %c4_75 = arith.constant 4 : index
    %145 = memref.load %arg1[%c1_74, %c4_75] : memref<6x10xf32, #tpu.memory_space<smem>>
    %146 = vector.broadcast %145 : f32 to vector<8x128xf32>
    %147 = arith.mulf %3, %146 : vector<8x128xf32>
    %148 = arith.addf %144, %147 : vector<8x128xf32>
    %c2_76 = arith.constant 2 : index
    %c4_77 = arith.constant 4 : index
    %149 = memref.load %arg1[%c2_76, %c4_77] : memref<6x10xf32, #tpu.memory_space<smem>>
    %150 = vector.broadcast %149 : f32 to vector<8x128xf32>
    %151 = arith.mulf %5, %150 : vector<8x128xf32>
    %152 = arith.addf %148, %151 : vector<8x128xf32>
    %c3_78 = arith.constant 3 : index
    %c4_79 = arith.constant 4 : index
    %153 = memref.load %arg1[%c3_78, %c4_79] : memref<6x10xf32, #tpu.memory_space<smem>>
    %154 = vector.broadcast %153 : f32 to vector<8x128xf32>
    %155 = arith.mulf %7, %154 : vector<8x128xf32>
    %156 = arith.addf %152, %155 : vector<8x128xf32>
    %c4_80 = arith.constant 4 : index
    %c4_81 = arith.constant 4 : index
    %157 = memref.load %arg1[%c4_80, %c4_81] : memref<6x10xf32, #tpu.memory_space<smem>>
    %158 = vector.broadcast %157 : f32 to vector<8x128xf32>
    %159 = arith.mulf %9, %158 : vector<8x128xf32>
    %160 = arith.addf %156, %159 : vector<8x128xf32>
    %c5_82 = arith.constant 5 : index
    %c4_83 = arith.constant 4 : index
    %161 = memref.load %arg1[%c5_82, %c4_83] : memref<6x10xf32, #tpu.memory_space<smem>>
    %162 = vector.broadcast %161 : f32 to vector<8x128xf32>
    %163 = arith.mulf %11, %162 : vector<8x128xf32>
    %164 = arith.addf %160, %163 : vector<8x128xf32>
    %cst_84 = arith.constant 0.000000e+00 : f32
    %165 = vector.broadcast %cst_84 : f32 to vector<8x128xf32>
    %166 = arith.maximumf %164, %165 : vector<8x128xf32>
    %c4_85 = arith.constant 4 : index
    %167 = memref.load %arg3[%c4_85] : memref<10xf32, #tpu.memory_space<smem>>
    %168 = vector.broadcast %167 : f32 to vector<8x128xf32>
    %169 = arith.mulf %166, %168 : vector<8x128xf32>
    %170 = arith.addf %138, %169 : vector<8x128xf32>
    %c0_86 = arith.constant 0 : index
    %c5_87 = arith.constant 5 : index
    %171 = memref.load %arg1[%c0_86, %c5_87] : memref<6x10xf32, #tpu.memory_space<smem>>
    %172 = vector.broadcast %171 : f32 to vector<8x128xf32>
    %173 = arith.mulf %1, %172 : vector<8x128xf32>
    %c5_88 = arith.constant 5 : index
    %174 = memref.load %arg2[%c5_88] : memref<10xf32, #tpu.memory_space<smem>>
    %175 = vector.broadcast %174 : f32 to vector<8x128xf32>
    %176 = arith.addf %173, %175 : vector<8x128xf32>
    %c1_89 = arith.constant 1 : index
    %c5_90 = arith.constant 5 : index
    %177 = memref.load %arg1[%c1_89, %c5_90] : memref<6x10xf32, #tpu.memory_space<smem>>
    %178 = vector.broadcast %177 : f32 to vector<8x128xf32>
    %179 = arith.mulf %3, %178 : vector<8x128xf32>
    %180 = arith.addf %176, %179 : vector<8x128xf32>
    %c2_91 = arith.constant 2 : index
    %c5_92 = arith.constant 5 : index
    %181 = memref.load %arg1[%c2_91, %c5_92] : memref<6x10xf32, #tpu.memory_space<smem>>
    %182 = vector.broadcast %181 : f32 to vector<8x128xf32>
    %183 = arith.mulf %5, %182 : vector<8x128xf32>
    %184 = arith.addf %180, %183 : vector<8x128xf32>
    %c3_93 = arith.constant 3 : index
    %c5_94 = arith.constant 5 : index
    %185 = memref.load %arg1[%c3_93, %c5_94] : memref<6x10xf32, #tpu.memory_space<smem>>
    %186 = vector.broadcast %185 : f32 to vector<8x128xf32>
    %187 = arith.mulf %7, %186 : vector<8x128xf32>
    %188 = arith.addf %184, %187 : vector<8x128xf32>
    %c4_95 = arith.constant 4 : index
    %c5_96 = arith.constant 5 : index
    %189 = memref.load %arg1[%c4_95, %c5_96] : memref<6x10xf32, #tpu.memory_space<smem>>
    %190 = vector.broadcast %189 : f32 to vector<8x128xf32>
    %191 = arith.mulf %9, %190 : vector<8x128xf32>
    %192 = arith.addf %188, %191 : vector<8x128xf32>
    %c5_97 = arith.constant 5 : index
    %c5_98 = arith.constant 5 : index
    %193 = memref.load %arg1[%c5_97, %c5_98] : memref<6x10xf32, #tpu.memory_space<smem>>
    %194 = vector.broadcast %193 : f32 to vector<8x128xf32>
    %195 = arith.mulf %11, %194 : vector<8x128xf32>
    %196 = arith.addf %192, %195 : vector<8x128xf32>
    %cst_99 = arith.constant 0.000000e+00 : f32
    %197 = vector.broadcast %cst_99 : f32 to vector<8x128xf32>
    %198 = arith.maximumf %196, %197 : vector<8x128xf32>
    %c5_100 = arith.constant 5 : index
    %199 = memref.load %arg3[%c5_100] : memref<10xf32, #tpu.memory_space<smem>>
    %200 = vector.broadcast %199 : f32 to vector<8x128xf32>
    %201 = arith.mulf %198, %200 : vector<8x128xf32>
    %202 = arith.addf %170, %201 : vector<8x128xf32>
    %c0_101 = arith.constant 0 : index
    %c6 = arith.constant 6 : index
    %203 = memref.load %arg1[%c0_101, %c6] : memref<6x10xf32, #tpu.memory_space<smem>>
    %204 = vector.broadcast %203 : f32 to vector<8x128xf32>
    %205 = arith.mulf %1, %204 : vector<8x128xf32>
    %c6_102 = arith.constant 6 : index
    %206 = memref.load %arg2[%c6_102] : memref<10xf32, #tpu.memory_space<smem>>
    %207 = vector.broadcast %206 : f32 to vector<8x128xf32>
    %208 = arith.addf %205, %207 : vector<8x128xf32>
    %c1_103 = arith.constant 1 : index
    %c6_104 = arith.constant 6 : index
    %209 = memref.load %arg1[%c1_103, %c6_104] : memref<6x10xf32, #tpu.memory_space<smem>>
    %210 = vector.broadcast %209 : f32 to vector<8x128xf32>
    %211 = arith.mulf %3, %210 : vector<8x128xf32>
    %212 = arith.addf %208, %211 : vector<8x128xf32>
    %c2_105 = arith.constant 2 : index
    %c6_106 = arith.constant 6 : index
    %213 = memref.load %arg1[%c2_105, %c6_106] : memref<6x10xf32, #tpu.memory_space<smem>>
    %214 = vector.broadcast %213 : f32 to vector<8x128xf32>
    %215 = arith.mulf %5, %214 : vector<8x128xf32>
    %216 = arith.addf %212, %215 : vector<8x128xf32>
    %c3_107 = arith.constant 3 : index
    %c6_108 = arith.constant 6 : index
    %217 = memref.load %arg1[%c3_107, %c6_108] : memref<6x10xf32, #tpu.memory_space<smem>>
    %218 = vector.broadcast %217 : f32 to vector<8x128xf32>
    %219 = arith.mulf %7, %218 : vector<8x128xf32>
    %220 = arith.addf %216, %219 : vector<8x128xf32>
    %c4_109 = arith.constant 4 : index
    %c6_110 = arith.constant 6 : index
    %221 = memref.load %arg1[%c4_109, %c6_110] : memref<6x10xf32, #tpu.memory_space<smem>>
    %222 = vector.broadcast %221 : f32 to vector<8x128xf32>
    %223 = arith.mulf %9, %222 : vector<8x128xf32>
    %224 = arith.addf %220, %223 : vector<8x128xf32>
    %c5_111 = arith.constant 5 : index
    %c6_112 = arith.constant 6 : index
    %225 = memref.load %arg1[%c5_111, %c6_112] : memref<6x10xf32, #tpu.memory_space<smem>>
    %226 = vector.broadcast %225 : f32 to vector<8x128xf32>
    %227 = arith.mulf %11, %226 : vector<8x128xf32>
    %228 = arith.addf %224, %227 : vector<8x128xf32>
    %cst_113 = arith.constant 0.000000e+00 : f32
    %229 = vector.broadcast %cst_113 : f32 to vector<8x128xf32>
    %230 = arith.maximumf %228, %229 : vector<8x128xf32>
    %c6_114 = arith.constant 6 : index
    %231 = memref.load %arg3[%c6_114] : memref<10xf32, #tpu.memory_space<smem>>
    %232 = vector.broadcast %231 : f32 to vector<8x128xf32>
    %233 = arith.mulf %230, %232 : vector<8x128xf32>
    %234 = arith.addf %202, %233 : vector<8x128xf32>
    %c0_115 = arith.constant 0 : index
    %c7 = arith.constant 7 : index
    %235 = memref.load %arg1[%c0_115, %c7] : memref<6x10xf32, #tpu.memory_space<smem>>
    %236 = vector.broadcast %235 : f32 to vector<8x128xf32>
    %237 = arith.mulf %1, %236 : vector<8x128xf32>
    %c7_116 = arith.constant 7 : index
    %238 = memref.load %arg2[%c7_116] : memref<10xf32, #tpu.memory_space<smem>>
    %239 = vector.broadcast %238 : f32 to vector<8x128xf32>
    %240 = arith.addf %237, %239 : vector<8x128xf32>
    %c1_117 = arith.constant 1 : index
    %c7_118 = arith.constant 7 : index
    %241 = memref.load %arg1[%c1_117, %c7_118] : memref<6x10xf32, #tpu.memory_space<smem>>
    %242 = vector.broadcast %241 : f32 to vector<8x128xf32>
    %243 = arith.mulf %3, %242 : vector<8x128xf32>
    %244 = arith.addf %240, %243 : vector<8x128xf32>
    %c2_119 = arith.constant 2 : index
    %c7_120 = arith.constant 7 : index
    %245 = memref.load %arg1[%c2_119, %c7_120] : memref<6x10xf32, #tpu.memory_space<smem>>
    %246 = vector.broadcast %245 : f32 to vector<8x128xf32>
    %247 = arith.mulf %5, %246 : vector<8x128xf32>
    %248 = arith.addf %244, %247 : vector<8x128xf32>
    %c3_121 = arith.constant 3 : index
    %c7_122 = arith.constant 7 : index
    %249 = memref.load %arg1[%c3_121, %c7_122] : memref<6x10xf32, #tpu.memory_space<smem>>
    %250 = vector.broadcast %249 : f32 to vector<8x128xf32>
    %251 = arith.mulf %7, %250 : vector<8x128xf32>
    %252 = arith.addf %248, %251 : vector<8x128xf32>
    %c4_123 = arith.constant 4 : index
    %c7_124 = arith.constant 7 : index
    %253 = memref.load %arg1[%c4_123, %c7_124] : memref<6x10xf32, #tpu.memory_space<smem>>
    %254 = vector.broadcast %253 : f32 to vector<8x128xf32>
    %255 = arith.mulf %9, %254 : vector<8x128xf32>
    %256 = arith.addf %252, %255 : vector<8x128xf32>
    %c5_125 = arith.constant 5 : index
    %c7_126 = arith.constant 7 : index
    %257 = memref.load %arg1[%c5_125, %c7_126] : memref<6x10xf32, #tpu.memory_space<smem>>
    %258 = vector.broadcast %257 : f32 to vector<8x128xf32>
    %259 = arith.mulf %11, %258 : vector<8x128xf32>
    %260 = arith.addf %256, %259 : vector<8x128xf32>
    %cst_127 = arith.constant 0.000000e+00 : f32
    %261 = vector.broadcast %cst_127 : f32 to vector<8x128xf32>
    %262 = arith.maximumf %260, %261 : vector<8x128xf32>
    %c7_128 = arith.constant 7 : index
    %263 = memref.load %arg3[%c7_128] : memref<10xf32, #tpu.memory_space<smem>>
    %264 = vector.broadcast %263 : f32 to vector<8x128xf32>
    %265 = arith.mulf %262, %264 : vector<8x128xf32>
    %266 = arith.addf %234, %265 : vector<8x128xf32>
    %c0_129 = arith.constant 0 : index
    %c8 = arith.constant 8 : index
    %267 = memref.load %arg1[%c0_129, %c8] : memref<6x10xf32, #tpu.memory_space<smem>>
    %268 = vector.broadcast %267 : f32 to vector<8x128xf32>
    %269 = arith.mulf %1, %268 : vector<8x128xf32>
    %c8_130 = arith.constant 8 : index
    %270 = memref.load %arg2[%c8_130] : memref<10xf32, #tpu.memory_space<smem>>
    %271 = vector.broadcast %270 : f32 to vector<8x128xf32>
    %272 = arith.addf %269, %271 : vector<8x128xf32>
    %c1_131 = arith.constant 1 : index
    %c8_132 = arith.constant 8 : index
    %273 = memref.load %arg1[%c1_131, %c8_132] : memref<6x10xf32, #tpu.memory_space<smem>>
    %274 = vector.broadcast %273 : f32 to vector<8x128xf32>
    %275 = arith.mulf %3, %274 : vector<8x128xf32>
    %276 = arith.addf %272, %275 : vector<8x128xf32>
    %c2_133 = arith.constant 2 : index
    %c8_134 = arith.constant 8 : index
    %277 = memref.load %arg1[%c2_133, %c8_134] : memref<6x10xf32, #tpu.memory_space<smem>>
    %278 = vector.broadcast %277 : f32 to vector<8x128xf32>
    %279 = arith.mulf %5, %278 : vector<8x128xf32>
    %280 = arith.addf %276, %279 : vector<8x128xf32>
    %c3_135 = arith.constant 3 : index
    %c8_136 = arith.constant 8 : index
    %281 = memref.load %arg1[%c3_135, %c8_136] : memref<6x10xf32, #tpu.memory_space<smem>>
    %282 = vector.broadcast %281 : f32 to vector<8x128xf32>
    %283 = arith.mulf %7, %282 : vector<8x128xf32>
    %284 = arith.addf %280, %283 : vector<8x128xf32>
    %c4_137 = arith.constant 4 : index
    %c8_138 = arith.constant 8 : index
    %285 = memref.load %arg1[%c4_137, %c8_138] : memref<6x10xf32, #tpu.memory_space<smem>>
    %286 = vector.broadcast %285 : f32 to vector<8x128xf32>
    %287 = arith.mulf %9, %286 : vector<8x128xf32>
    %288 = arith.addf %284, %287 : vector<8x128xf32>
    %c5_139 = arith.constant 5 : index
    %c8_140 = arith.constant 8 : index
    %289 = memref.load %arg1[%c5_139, %c8_140] : memref<6x10xf32, #tpu.memory_space<smem>>
    %290 = vector.broadcast %289 : f32 to vector<8x128xf32>
    %291 = arith.mulf %11, %290 : vector<8x128xf32>
    %292 = arith.addf %288, %291 : vector<8x128xf32>
    %cst_141 = arith.constant 0.000000e+00 : f32
    %293 = vector.broadcast %cst_141 : f32 to vector<8x128xf32>
    %294 = arith.maximumf %292, %293 : vector<8x128xf32>
    %c8_142 = arith.constant 8 : index
    %295 = memref.load %arg3[%c8_142] : memref<10xf32, #tpu.memory_space<smem>>
    %296 = vector.broadcast %295 : f32 to vector<8x128xf32>
    %297 = arith.mulf %294, %296 : vector<8x128xf32>
    %298 = arith.addf %266, %297 : vector<8x128xf32>
    %c0_143 = arith.constant 0 : index
    %c9 = arith.constant 9 : index
    %299 = memref.load %arg1[%c0_143, %c9] : memref<6x10xf32, #tpu.memory_space<smem>>
    %300 = vector.broadcast %299 : f32 to vector<8x128xf32>
    %301 = arith.mulf %1, %300 : vector<8x128xf32>
    %c9_144 = arith.constant 9 : index
    %302 = memref.load %arg2[%c9_144] : memref<10xf32, #tpu.memory_space<smem>>
    %303 = vector.broadcast %302 : f32 to vector<8x128xf32>
    %304 = arith.addf %301, %303 : vector<8x128xf32>
    %c1_145 = arith.constant 1 : index
    %c9_146 = arith.constant 9 : index
    %305 = memref.load %arg1[%c1_145, %c9_146] : memref<6x10xf32, #tpu.memory_space<smem>>
    %306 = vector.broadcast %305 : f32 to vector<8x128xf32>
    %307 = arith.mulf %3, %306 : vector<8x128xf32>
    %308 = arith.addf %304, %307 : vector<8x128xf32>
    %c2_147 = arith.constant 2 : index
    %c9_148 = arith.constant 9 : index
    %309 = memref.load %arg1[%c2_147, %c9_148] : memref<6x10xf32, #tpu.memory_space<smem>>
    %310 = vector.broadcast %309 : f32 to vector<8x128xf32>
    %311 = arith.mulf %5, %310 : vector<8x128xf32>
    %312 = arith.addf %308, %311 : vector<8x128xf32>
    %c3_149 = arith.constant 3 : index
    %c9_150 = arith.constant 9 : index
    %313 = memref.load %arg1[%c3_149, %c9_150] : memref<6x10xf32, #tpu.memory_space<smem>>
    %314 = vector.broadcast %313 : f32 to vector<8x128xf32>
    %315 = arith.mulf %7, %314 : vector<8x128xf32>
    %316 = arith.addf %312, %315 : vector<8x128xf32>
    %c4_151 = arith.constant 4 : index
    %c9_152 = arith.constant 9 : index
    %317 = memref.load %arg1[%c4_151, %c9_152] : memref<6x10xf32, #tpu.memory_space<smem>>
    %318 = vector.broadcast %317 : f32 to vector<8x128xf32>
    %319 = arith.mulf %9, %318 : vector<8x128xf32>
    %320 = arith.addf %316, %319 : vector<8x128xf32>
    %c5_153 = arith.constant 5 : index
    %c9_154 = arith.constant 9 : index
    %321 = memref.load %arg1[%c5_153, %c9_154] : memref<6x10xf32, #tpu.memory_space<smem>>
    %322 = vector.broadcast %321 : f32 to vector<8x128xf32>
    %323 = arith.mulf %11, %322 : vector<8x128xf32>
    %324 = arith.addf %320, %323 : vector<8x128xf32>
    %cst_155 = arith.constant 0.000000e+00 : f32
    %325 = vector.broadcast %cst_155 : f32 to vector<8x128xf32>
    %326 = arith.maximumf %324, %325 : vector<8x128xf32>
    %c9_156 = arith.constant 9 : index
    %327 = memref.load %arg3[%c9_156] : memref<10xf32, #tpu.memory_space<smem>>
    %328 = vector.broadcast %327 : f32 to vector<8x128xf32>
    %329 = arith.mulf %326, %328 : vector<8x128xf32>
    %330 = arith.addf %298, %329 : vector<8x128xf32>
    %c0_157 = arith.constant 0 : index
    %331 = memref.load %arg4[%c0_157] : memref<1xf32, #tpu.memory_space<smem>>
    %332 = vector.broadcast %331 : f32 to vector<8x128xf32>
    %333 = arith.addf %330, %332 : vector<8x128xf32>
    %c0_158 = arith.constant 0 : index
    %c0_159 = arith.constant 0 : index
    %334 = vector.load %arg6[%c0_158, %c0_159] : memref<8x128xf32, #tpu.memory_space<vmem>>, vector<8x128xf32>
    tpu.vector_store %arg6[%c0_158, %c0_159], %333 {strides = array<i32>} : memref<8x128xf32, #tpu.memory_space<vmem>>, vector<8x128xf32>,
    return
  }
  func.func @transform_0(%arg0: i32) -> (i32, i32) {
    %c0_i32 = arith.constant 0 : i32
    %c0_i32_0 = arith.constant 0 : i32
    %c0_i32_1 = arith.constant 0 : i32
    return %c0_i32, %c0_i32_0 : i32, i32
  }
  func.func @transform_1(%arg0: i32) -> i32 {
    %c0_i32 = arith.constant 0 : i32
    %c0_i32_0 = arith.constant 0 : i32
    return %c0_i32 : i32
  }
  func.func @transform_2(%arg0: i32) -> i32 {
    %c0_i32 = arith.constant 0 : i32
    %c0_i32_0 = arith.constant 0 : i32
    return %c0_i32 : i32
  }
  func.func @transform_3(%arg0: i32) -> i32 {
    %c0_i32 = arith.constant 0 : i32
    %c0_i32_0 = arith.constant 0 : i32
    return %c0_i32 : i32
  }
  func.func @transform_4(%arg0: i32) -> (i32, i32, i32) {
    %c0_i32 = arith.constant 0 : i32
    %c0_i32_0 = arith.constant 0 : i32
    %c0_i32_1 = arith.constant 0 : i32
    return %c0_i32, %c0_i32_0, %arg0 : i32, i32, i32
  }
  func.func @transform_5(%arg0: i32) -> (i32, i32) {
    %c0_i32 = arith.constant 0 : i32
    %c0_i32_0 = arith.constant 0 : i32
    return %c0_i32, %arg0 : i32, i32
  }
}

</mosaic_0001>

<llo_original>
// kernel: denoise_block.1
$region0: #{denoise_block.1}
  #allocation0 [shape = 'u32[]', space=smem, size = 0x4, offset = 0x4, fixed_abs, tag = 'smem constant byte address 0x4 - core index']
  #allocation1 [shape = 'u32[72,128]{1,0:T(1,128)}', space=vmem, size = 0x9000, scoped, tag = 'internal scratch']
  #allocation2 [shape = 'f32[1]{0:T(128)S(6)}', space=smem, size = 0x200, scoped, tag = 'scoped memory for denoise_block.1']
  %s0 = inlined_call_operand.vmem [shape: f32[6,10], index: 0, kind: input, shape index: {}]
  %s1 = inlined_call_operand.vmem [shape: f32[10], index: 1, kind: input, shape index: {}]
  %s2 = inlined_call_operand.vmem [shape: f32[10], index: 2, kind: input, shape index: {}]
  %s3 = inlined_call_operand.<no memory space> [shape: f32[1], index: 3, kind: input, shape index: {}]
  %s4 = inlined_call_operand.vmem [shape: f32[6,8,128], index: 4, kind: input, shape index: {}]
  %s5 = inlined_call_operand.vmem [shape: f32[8,128], index: 5, kind: output, shape index: {}]
  %s6 = sld [smem:[#allocation0]]
  $region42: #{denoise_block.1} parent=0
    _
  %s8 = ssub.s32 1, %s6
  %s9 = scalar_select 0, %s8, %s6
  %10 = sst [smem:[#allocation2]] %s3
  $region1: #{denoise_block.1} parent=0
    #allocation3 [shape = 'u8[4096]{0}', space=smem, size = 0x1000, scoped, tag = 'input window, operand 0, single buffered']
    #allocation4 [shape = 's32[1]{0}', space=sflag, size = 0x4, scoped, tag = 'scoped memory for denoise_block.1']
    #allocation5 [shape = 'u8[512]{0}', space=smem, size = 0x200, scoped, tag = 'input window, operand 1, single buffered']
    #allocation6 [shape = 's32[1]{0}', space=sflag, size = 0x4, scoped, tag = 'scoped memory for denoise_block.1']
    #allocation7 [shape = 'u8[512]{0}', space=smem, size = 0x200, scoped, tag = 'input window, operand 2, single buffered']
    %11 = vsyncpa [#allocation4], 0
    %12 = vsyncpa [#allocation6], 0
    // Predicated region
    $region2: #{denoise_block.1} parent=1 // pred_check
      _
    $region3: #{denoise_block.1} parent=1 // pred_check_branch
      %14 = sbr.rel (0) target = $region5
    $region4: #{denoise_block.1} parent=1 // pred_region
      %16 = vsyncadd [#allocation4], 0
      %s18 = sshll.u32 %s0, 4
      %s19 = int_to_ptr.vmem [resolvable:$true] %s18
      %21 = dma.vmem_to_smem %s19, 128, [#allocation3], [#allocation4]
    $region5: #{denoise_block.1} parent=1 // pred_fallthru
      _
    // Predicated region
    $region6: #{denoise_block.1} parent=1 // pred_check
      _
    $region7: #{denoise_block.1} parent=1 // pred_check_branch
      %23 = sbr.rel (0) target = $region9
    $region8: #{denoise_block.1} parent=1 // pred_region
      %25 = vsyncadd [#allocation6], 0
      %s27 = sshll.u32 %s1, 4
      %s28 = int_to_ptr.vmem [resolvable:$true] %s27
      %30 = dma.vmem_to_smem %s28, 16, [#allocation5], [#allocation6]
    $region9: #{denoise_block.1} parent=1 // pred_fallthru
      _
    // Predicated region
    $region10: #{denoise_block.1} parent=1 // pred_check
      _
    $region11: #{denoise_block.1} parent=1 // pred_check_branch
      %32 = sbr.rel (0) target = $region13
    $region12: #{denoise_block.1} parent=1 // pred_region
      %34 = vsyncadd [#allocation6], 0
      %s36 = sshll.u32 %s2, 4
      %s37 = int_to_ptr.vmem [resolvable:$true] %s36
      %39 = dma.vmem_to_smem %s37, 16, [#allocation7], [#allocation6]
    $region13: #{denoise_block.1} parent=1 // pred_fallthru
      _
    // Predicated region
    $region14: #{denoise_block.1} parent=1 // pred_check
      _
    $region15: #{denoise_block.1} parent=1 // pred_check_branch
      %41 = sbr.rel (0) target = $region17
    $region16: #{denoise_block.1} parent=1 // pred_region
      _
    $region17: #{denoise_block.1} parent=1 // pred_fallthru
      _
    // Predicated region
    $region18: #{denoise_block.1} parent=1 // pred_check
      _
    $region19: #{denoise_block.1} parent=1 // pred_check_branch
      %43 = sbr.rel (0) target = $region21
    $region20: #{denoise_block.1} parent=1 // pred_region
      _
    $region21: #{denoise_block.1} parent=1 // pred_fallthru
      _
    // Predicated region
    $region22: #{denoise_block.1} parent=1 // pred_check
      _
    $region23: #{denoise_block.1} parent=1 // pred_check_branch
      %45 = sbr.rel (0) target = $region25
    $region24: #{denoise_block.1} parent=1 // pred_region
      %47 = dma.done [#allocation4], 128
    $region25: #{denoise_block.1} parent=1 // pred_fallthru
      _
    // Predicated region
    $region26: #{denoise_block.1} parent=1 // pred_check
      _
    $region27: #{denoise_block.1} parent=1 // pred_check_branch
      %49 = sbr.rel (0) target = $region29
    $region28: #{denoise_block.1} parent=1 // pred_region
      %51 = dma.done [#allocation6], 16
    $region29: #{denoise_block.1} parent=1 // pred_fallthru
      _
    // Predicated region
    $region30: #{denoise_block.1} parent=1 // pred_check
      _
    $region31: #{denoise_block.1} parent=1 // pred_check_branch
      %53 = sbr.rel (0) target = $region33
    $region32: #{denoise_block.1} parent=1 // pred_region
      %55 = dma.done [#allocation6], 16
    $region33: #{denoise_block.1} parent=1 // pred_fallthru
      _
    %56 = sfence
    %v57 = vld [vmem:[%s4] sm:$0xff]
    %s58 = scalar_lea.vmem %s4, 8
    %v59 = vld [vmem:[%s58] sm:$0xff]
    %s60 = scalar_lea.vmem %s4, 16
    %v61 = vld [vmem:[%s60] sm:$0xff]
    %s62 = scalar_lea.vmem %s4, 24
    %v63 = vld [vmem:[%s62] sm:$0xff]
    %s64 = scalar_lea.vmem %s4, 32
    %v65 = vld [vmem:[%s64] sm:$0xff]
    %s66 = scalar_lea.vmem %s4, 40
    %v67 = vld [vmem:[%s66] sm:$0xff]
    %s68 = sld [smem:[#allocation3]]
    %v69 = vstv %s68
    %v70 = vmul.f32 %v57, %v69
    %s71 = sld [smem:[#allocation5]]
    %v72 = vstv %s71
    %v73 = vadd.f32 %v70, %v72
    %s74 = sld [smem:[#allocation3 + $0x80]]
    %v75 = vstv %s74
    %v76 = vmul.f32 %v59, %v75
    %v77 = vadd.f32 %v73, %v76
    %s78 = sld [smem:[#allocation3 + $0x100]]
    %v79 = vstv %s78
    %v80 = vmul.f32 %v61, %v79
    %v81 = vadd.f32 %v77, %v80
    %s82 = sld [smem:[#allocation3 + $0x180]]
    %v83 = vstv %s82
    %v84 = vmul.f32 %v63, %v83
    %v85 = vadd.f32 %v81, %v84
    %s86 = sld [smem:[#allocation3 + $0x200]]
    %v87 = vstv %s86
    %v88 = vmul.f32 %v65, %v87
    %v89 = vadd.f32 %v85, %v88
    %s90 = sld [smem:[#allocation3 + $0x280]]
    %v91 = vstv %s90
    %v92 = vmul.f32 %v67, %v91
    %v93 = vadd.f32 %v89, %v92
    %v94 = vmax.f32 %v93, 0.0
    %s95 = sld [smem:[#allocation7]]
    %v96 = vstv %s95
    %v97 = vmul.f32 %v94, %v96
    %s98 = sld [smem:[#allocation3 + $0x1]]
    %v99 = vstv %s98
    %v100 = vmul.f32 %v57, %v99
    %s101 = sld [smem:[#allocation5 + $0x1]]
    %v102 = vstv %s101
    %v103 = vadd.f32 %v100, %v102
    %s104 = sld [smem:[#allocation3 + $0x81]]
    %v105 = vstv %s104
    %v106 = vmul.f32 %v59, %v105
    %v107 = vadd.f32 %v103, %v106
    %s108 = sld [smem:[#allocation3 + $0x101]]
    %v109 = vstv %s108
    %v110 = vmul.f32 %v61, %v109
    %v111 = vadd.f32 %v107, %v110
    %s112 = sld [smem:[#allocation3 + $0x181]]
    %v113 = vstv %s112
    %v114 = vmul.f32 %v63, %v113
    %v115 = vadd.f32 %v111, %v114
    %s116 = sld [smem:[#allocation3 + $0x201]]
    %v117 = vstv %s116
    %v118 = vmul.f32 %v65, %v117
    %v119 = vadd.f32 %v115, %v118
    %s120 = sld [smem:[#allocation3 + $0x281]]
    %v121 = vstv %s120
    %v122 = vmul.f32 %v67, %v121
    %v123 = vadd.f32 %v119, %v122
    %v124 = vmax.f32 %v123, 0.0
    %s125 = sld [smem:[#allocation7 + $0x1]]
    %v126 = vstv %s125
    %v127 = vmul.f32 %v124, %v126
    %v128 = vadd.f32 %v97, %v127
    %s129 = sld [smem:[#allocation3 + $0x2]]
    %v130 = vstv %s129
    %v131 = vmul.f32 %v57, %v130
    %s132 = sld [smem:[#allocation5 + $0x2]]
    %v133 = vstv %s132
    %v134 = vadd.f32 %v131, %v133
    %s135 = sld [smem:[#allocation3 + $0x82]]
    %v136 = vstv %s135
    %v137 = vmul.f32 %v59, %v136
    %v138 = vadd.f32 %v134, %v137
    %s139 = sld [smem:[#allocation3 + $0x102]]
    %v140 = vstv %s139
    %v141 = vmul.f32 %v61, %v140
    %v142 = vadd.f32 %v138, %v141
    %s143 = sld [smem:[#allocation3 + $0x182]]
    %v144 = vstv %s143
    %v145 = vmul.f32 %v63, %v144
    %v146 = vadd.f32 %v142, %v145
    %s147 = sld [smem:[#allocation3 + $0x202]]
    %v148 = vstv %s147
    %v149 = vmul.f32 %v65, %v148
    %v150 = vadd.f32 %v146, %v149
    %s151 = sld [smem:[#allocation3 + $0x282]]
    %v152 = vstv %s151
    %v153 = vmul.f32 %v67, %v152
    %v154 = vadd.f32 %v150, %v153
    %v155 = vmax.f32 %v154, 0.0
    %s156 = sld [smem:[#allocation7 + $0x2]]
    %v157 = vstv %s156
    %v158 = vmul.f32 %v155, %v157
    %v159 = vadd.f32 %v128, %v158
    %s160 = sld [smem:[#allocation3 + $0x3]]
    %v161 = vstv %s160
    %v162 = vmul.f32 %v57, %v161
    %s163 = sld [smem:[#allocation5 + $0x3]]
    %v164 = vstv %s163
    %v165 = vadd.f32 %v162, %v164
    %s166 = sld [smem:[#allocation3 + $0x83]]
    %v167 = vstv %s166
    %v168 = vmul.f32 %v59, %v167
    %v169 = vadd.f32 %v165, %v168
    %s170 = sld [smem:[#allocation3 + $0x103]]
    %v171 = vstv %s170
    %v172 = vmul.f32 %v61, %v171
    %v173 = vadd.f32 %v169, %v172
    %s174 = sld [smem:[#allocation3 + $0x183]]
    %v175 = vstv %s174
    %v176 = vmul.f32 %v63, %v175
    %v177 = vadd.f32 %v173, %v176
    %s178 = sld [smem:[#allocation3 + $0x203]]
    %v179 = vstv %s178
    %v180 = vmul.f32 %v65, %v179
    %v181 = vadd.f32 %v177, %v180
    %s182 = sld [smem:[#allocation3 + $0x283]]
    %v183 = vstv %s182
    %v184 = vmul.f32 %v67, %v183
    %v185 = vadd.f32 %v181, %v184
    %v186 = vmax.f32 %v185, 0.0
    %s187 = sld [smem:[#allocation7 + $0x3]]
    %v188 = vstv %s187
    %v189 = vmul.f32 %v186, %v188
    %v190 = vadd.f32 %v159, %v189
    %s191 = sld [smem:[#allocation3 + $0x4]]
    %v192 = vstv %s191
    %v193 = vmul.f32 %v57, %v192
    %s194 = sld [smem:[#allocation5 + $0x4]]
    %v195 = vstv %s194
    %v196 = vadd.f32 %v193, %v195
    %s197 = sld [smem:[#allocation3 + $0x84]]
    %v198 = vstv %s197
    %v199 = vmul.f32 %v59, %v198
    %v200 = vadd.f32 %v196, %v199
    %s201 = sld [smem:[#allocation3 + $0x104]]
    %v202 = vstv %s201
    %v203 = vmul.f32 %v61, %v202
    %v204 = vadd.f32 %v200, %v203
    %s205 = sld [smem:[#allocation3 + $0x184]]
    %v206 = vstv %s205
    %v207 = vmul.f32 %v63, %v206
    %v208 = vadd.f32 %v204, %v207
    %s209 = sld [smem:[#allocation3 + $0x204]]
    %v210 = vstv %s209
    %v211 = vmul.f32 %v65, %v210
    %v212 = vadd.f32 %v208, %v211
    %s213 = sld [smem:[#allocation3 + $0x284]]
    %v214 = vstv %s213
    %v215 = vmul.f32 %v67, %v214
    %v216 = vadd.f32 %v212, %v215
    %v217 = vmax.f32 %v216, 0.0
    %s218 = sld [smem:[#allocation7 + $0x4]]
    %v219 = vstv %s218
    %v220 = vmul.f32 %v217, %v219
    %v221 = vadd.f32 %v190, %v220
    %s222 = sld [smem:[#allocation3 + $0x5]]
    %v223 = vstv %s222
    %v224 = vmul.f32 %v57, %v223
    %s225 = sld [smem:[#allocation5 + $0x5]]
    %v226 = vstv %s225
    %v227 = vadd.f32 %v224, %v226
    %s228 = sld [smem:[#allocation3 + $0x85]]
    %v229 = vstv %s228
    %v230 = vmul.f32 %v59, %v229
    %v231 = vadd.f32 %v227, %v230
    %s232 = sld [smem:[#allocation3 + $0x105]]
    %v233 = vstv %s232
    %v234 = vmul.f32 %v61, %v233
    %v235 = vadd.f32 %v231, %v234
    %s236 = sld [smem:[#allocation3 + $0x185]]
    %v237 = vstv %s236
    %v238 = vmul.f32 %v63, %v237
    %v239 = vadd.f32 %v235, %v238
    %s240 = sld [smem:[#allocation3 + $0x205]]
    %v241 = vstv %s240
    %v242 = vmul.f32 %v65, %v241
    %v243 = vadd.f32 %v239, %v242
    %s244 = sld [smem:[#allocation3 + $0x285]]
    %v245 = vstv %s244
    %v246 = vmul.f32 %v67, %v245
    %v247 = vadd.f32 %v243, %v246
    %v248 = vmax.f32 %v247, 0.0
    %s249 = sld [smem:[#allocation7 + $0x5]]
    %v250 = vstv %s249
    %v251 = vmul.f32 %v248, %v250
    %v252 = vadd.f32 %v221, %v251
    %s253 = sld [smem:[#allocation3 + $0x6]]
    %v254 = vstv %s253
    %v255 = vmul.f32 %v57, %v254
    %s256 = sld [smem:[#allocation5 + $0x6]]
    %v257 = vstv %s256
    %v258 = vadd.f32 %v255, %v257
    %s259 = sld [smem:[#allocation3 + $0x86]]
    %v260 = vstv %s259
    %v261 = vmul.f32 %v59, %v260
    %v262 = vadd.f32 %v258, %v261
    %s263 = sld [smem:[#allocation3 + $0x106]]
    %v264 = vstv %s263
    %v265 = vmul.f32 %v61, %v264
    %v266 = vadd.f32 %v262, %v265
    %s267 = sld [smem:[#allocation3 + $0x186]]
    %v268 = vstv %s267
    %v269 = vmul.f32 %v63, %v268
    %v270 = vadd.f32 %v266, %v269
    %s271 = sld [smem:[#allocation3 + $0x206]]
    %v272 = vstv %s271
    %v273 = vmul.f32 %v65, %v272
    %v274 = vadd.f32 %v270, %v273
    %s275 = sld [smem:[#allocation3 + $0x286]]
    %v276 = vstv %s275
    %v277 = vmul.f32 %v67, %v276
    %v278 = vadd.f32 %v274, %v277
    %v279 = vmax.f32 %v278, 0.0
    %s280 = sld [smem:[#allocation7 + $0x6]]
    %v281 = vstv %s280
    %v282 = vmul.f32 %v279, %v281
    %v283 = vadd.f32 %v252, %v282
    %s284 = sld [smem:[#allocation3 + $0x7]]
    %v285 = vstv %s284
    %v286 = vmul.f32 %v57, %v285
    %s287 = sld [smem:[#allocation5 + $0x7]]
    %v288 = vstv %s287
    %v289 = vadd.f32 %v286, %v288
    %s290 = sld [smem:[#allocation3 + $0x87]]
    %v291 = vstv %s290
    %v292 = vmul.f32 %v59, %v291
    %v293 = vadd.f32 %v289, %v292
    %s294 = sld [smem:[#allocation3 + $0x107]]
    %v295 = vstv %s294
    %v296 = vmul.f32 %v61, %v295
    %v297 = vadd.f32 %v293, %v296
    %s298 = sld [smem:[#allocation3 + $0x187]]
    %v299 = vstv %s298
    %v300 = vmul.f32 %v63, %v299
    %v301 = vadd.f32 %v297, %v300
    %s302 = sld [smem:[#allocation3 + $0x207]]
    %v303 = vstv %s302
    %v304 = vmul.f32 %v65, %v303
    %v305 = vadd.f32 %v301, %v304
    %s306 = sld [smem:[#allocation3 + $0x287]]
    %v307 = vstv %s306
    %v308 = vmul.f32 %v67, %v307
    %v309 = vadd.f32 %v305, %v308
    %v310 = vmax.f32 %v309, 0.0
    %s311 = sld [smem:[#allocation7 + $0x7]]
    %v312 = vstv %s311
    %v313 = vmul.f32 %v310, %v312
    %v314 = vadd.f32 %v283, %v313
    %s315 = sld [smem:[#allocation3 + $0x8]]
    %v316 = vstv %s315
    %v317 = vmul.f32 %v57, %v316
    %s318 = sld [smem:[#allocation5 + $0x8]]
    %v319 = vstv %s318
    %v320 = vadd.f32 %v317, %v319
    %s321 = sld [smem:[#allocation3 + $0x88]]
    %v322 = vstv %s321
    %v323 = vmul.f32 %v59, %v322
    %v324 = vadd.f32 %v320, %v323
    %s325 = sld [smem:[#allocation3 + $0x108]]
    %v326 = vstv %s325
    %v327 = vmul.f32 %v61, %v326
    %v328 = vadd.f32 %v324, %v327
    %s329 = sld [smem:[#allocation3 + $0x188]]
    %v330 = vstv %s329
    %v331 = vmul.f32 %v63, %v330
    %v332 = vadd.f32 %v328, %v331
    %s333 = sld [smem:[#allocation3 + $0x208]]
    %v334 = vstv %s333
    %v335 = vmul.f32 %v65, %v334
    %v336 = vadd.f32 %v332, %v335
    %s337 = sld [smem:[#allocation3 + $0x288]]
    %v338 = vstv %s337
    %v339 = vmul.f32 %v67, %v338
    %v340 = vadd.f32 %v336, %v339
    %v341 = vmax.f32 %v340, 0.0
    %s342 = sld [smem:[#allocation7 + $0x8]]
    %v343 = vstv %s342
    %v344 = vmul.f32 %v341, %v343
    %v345 = vadd.f32 %v314, %v344
    %s346 = sld [smem:[#allocation3 + $0x9]]
    %v347 = vstv %s346
    %v348 = vmul.f32 %v57, %v347
    %s349 = sld [smem:[#allocation5 + $0x9]]
    %v350 = vstv %s349
    %v351 = vadd.f32 %v348, %v350
    %s352 = sld [smem:[#allocation3 + $0x89]]
    %v353 = vstv %s352
    %v354 = vmul.f32 %v59, %v353
    %v355 = vadd.f32 %v351, %v354
    %s356 = sld [smem:[#allocation3 + $0x109]]
    %v357 = vstv %s356
    %v358 = vmul.f32 %v61, %v357
    %v359 = vadd.f32 %v355, %v358
    %s360 = sld [smem:[#allocation3 + $0x189]]
    %v361 = vstv %s360
    %v362 = vmul.f32 %v63, %v361
    %v363 = vadd.f32 %v359, %v362
    %s364 = sld [smem:[#allocation3 + $0x209]]
    %v365 = vstv %s364
    %v366 = vmul.f32 %v65, %v365
    %v367 = vadd.f32 %v363, %v366
    %s368 = sld [smem:[#allocation3 + $0x289]]
    %v369 = vstv %s368
    %v370 = vmul.f32 %v67, %v369
    %v371 = vadd.f32 %v367, %v370
    %v372 = vmax.f32 %v371, 0.0
    %s373 = sld [smem:[#allocation7 + $0x9]]
    %v374 = vstv %s373
    %v375 = vmul.f32 %v372, %v374
    %v376 = vadd.f32 %v345, %v375
    %s377 = sld [smem:[#allocation2]]
    %v378 = vstv %s377
    %v379 = vadd.f32 %v376, %v378
    %380 = vst [vmem:[%s5] sm:$0xff] %v379
    // Predicated region
    $region34: #{denoise_block.1} parent=1 // pred_check
      _
    $region35: #{denoise_block.1} parent=1 // pred_check_branch
      %382 = sbr.rel (0) target = $region37
    $region36: #{denoise_block.1} parent=1 // pred_region
      _
    $region37: #{denoise_block.1} parent=1 // pred_fallthru
      _
    // Predicated region
    $region38: #{denoise_block.1} parent=1 // pred_check
      _
    $region39: #{denoise_block.1} parent=1 // pred_check_branch
      %384 = sbr.rel (0) target = $region41
    $region40: #{denoise_block.1} parent=1 // pred_region
      _
    $region41: #{denoise_block.1} parent=1 // pred_fallthru
      _
    %385 = vsyncpa [#allocation4], 1
    %386 = vsyncpa [#allocation6], 1

</llo_original>
